<compile_context>
chip_gen: v7x
topology: tpu7x:2x2x1
jax: 0.10.0
libtpu: 0.0.40
codegen_flags: <defaults>
</compile_context>

<pallas_src>
import jax
import jax.numpy as jnp
from jax.experimental import pallas as pl
from jax.experimental.pallas import tpu as pltpu

D_IN, D_H, D_OUT = 165, 50, 2


def flmodel_kernel(x_ref, w1_ref, b1_ref, wd_ref, bd_ref, o_ref):
    # fc1 on the MXU (bf16 or f32 inputs, f32 accumulation).
    h = jnp.dot(x_ref[...], w1_ref[...], preferred_element_type=jnp.float32)
    h = jnp.maximum(h + b1_ref[...], 0.0)                                 # [TB, 50]

    # 2-class logit difference: one VPU multiply + a single XLU lane reduce.
    d = jnp.sum(h * wd_ref[...], axis=1, keepdims=True) + bd_ref[...]     # [TB, 1]

    # log_softmax over 2 classes:
    #   out_k = -softplus(s_k),  s = [-d, d]
    # Stable softplus(z) = log1p(exp(-|z|)) + max(z, 0); the log1p(exp(-|d|))
    # term is identical for both classes, so compute it once.
    sp = jnp.log1p(jnp.exp(-jnp.abs(d)))                                  # [TB, 1]
    s = jnp.concatenate([-d, d], axis=1)                                  # [TB, 2]
    o_ref[...] = (-(sp + jnp.maximum(s, 0.0))).astype(o_ref.dtype)


def flmodel_forward(x, w1, b1, w2, b2, *, block_b=1024,
                    compute_dtype=jnp.bfloat16):
    """x:[B,165]  w1:[165,50]  b1:[1,50]  w2:[50,2]  b2:[1,2] -> [B,2] log-probs."""
    B = x.shape[0]

    # Batch tile: biggest of (block_b, B); keep second-to-last dim legal
    # (multiple of 8, or equal to the full batch dim).
    tb = min(block_b, B)
    if tb != B and tb % 8 != 0:
        tb = max(8, (tb // 8) * 8)
    grid = (pl.cdiv(B, tb),)

    # bf16 the big streaming read (x) and its matching weight; the small
    # epilogue params stay f32.
    x_c = x.astype(compute_dtype)
    w1_c = w1.astype(compute_dtype)

    # Fold fc5 + bias into the 2-class difference (precomputed once, f32).
    wd = (w2[:, 0] - w2[:, 1]).reshape(1, D_H).astype(jnp.float32)   # [1, 50]
    bd = (b2[:, 0:1] - b2[:, 1:2]).astype(jnp.float32)               # [1, 1]
    b1f = b1.astype(jnp.float32)

    itemsize = jnp.dtype(compute_dtype).itemsize
    cost = pl.CostEstimate(
        flops=2 * B * D_IN * D_H + 2 * B * D_H,
        transcendentals=2 * B,
        bytes_accessed=(B * D_IN * itemsize + D_IN * D_H * itemsize
                        + (D_H + D_H + 1) * 4 + B * D_OUT * 4),
    )

    return pl.pallas_call(
        flmodel_kernel,
        out_shape=jax.ShapeDtypeStruct((B, D_OUT), jnp.float32),
        grid=grid,
        in_specs=[
            pl.BlockSpec((tb, D_IN), lambda i: (i, 0)),    # x: batch-tiled, pipelined
            pl.BlockSpec((D_IN, D_H), lambda i: (0, 0)),   # W1: VMEM-resident
            pl.BlockSpec((1, D_H), lambda i: (0, 0)),      # b1: resident
            pl.BlockSpec((1, D_H), lambda i: (0, 0)),      # w2[:,0]-w2[:,1]: resident
            pl.BlockSpec((1, 1), lambda i: (0, 0)),        # b2[0]-b2[1]: resident
        ],
        out_specs=pl.BlockSpec((tb, D_OUT), lambda i: (i, 0)),
        compiler_params=pltpu.CompilerParams(
            dimension_semantics=("parallel",),
        ),
        cost_estimate=cost,
    )(x_c, w1_c, b1f, wd, bd)


def reference_forward(x, w1, b1, w2, b2):
    h = jnp.maximum(x @ w1 + b1, 0.0)
    logits = h @ w2 + b2
    return jax.nn.log_softmax(logits, axis=1)


if __name__ == "__main__":
    key = jax.random.PRNGKey(0)
    k_x, k_w1, k_b1, k_w2, k_b2 = jax.random.split(key, 5)

    # Deterministic init mimicking PyTorch Linear's U(-1/sqrt(fan_in), 1/sqrt(fan_in)).
    lim1 = 1.0 / (D_IN ** 0.5)
    lim2 = 1.0 / (D_H ** 0.5)
    w1 = jax.random.uniform(k_w1, (D_IN, D_H), jnp.float32, -lim1, lim1)
    b1 = jax.random.uniform(k_b1, (1, D_H), jnp.float32, -lim1, lim1)
    w2 = jax.random.uniform(k_w2, (D_H, D_OUT), jnp.float32, -lim2, lim2)
    b2 = jax.random.uniform(k_b2, (1, D_OUT), jnp.float32, -lim2, lim2)

    # --- Small-batch check (single tile) ---
    B = 8
    x = jax.random.normal(k_x, (B, D_IN), dtype=jnp.float32)
    ref = reference_forward(x, w1, b1, w2, b2)

    # Exact-semantics path (f32 compute): strict check against the reference.
    out_f32 = flmodel_forward(x, w1, b1, w2, b2, compute_dtype=jnp.float32)
    jax.block_until_ready(out_f32)
    assert out_f32.shape == (B, D_OUT)
    assert jnp.allclose(out_f32, ref, atol=1e-5, rtol=1e-5)

    # Performance path (bf16 x / W1, f32 accumulation): loose check.
    out_bf16 = flmodel_forward(x, w1, b1, w2, b2, compute_dtype=jnp.bfloat16)
    jax.block_until_ready(out_bf16)
    assert out_bf16.shape == (B, D_OUT)
    assert bool(jnp.all(jnp.isfinite(out_bf16)))
    assert jnp.allclose(out_bf16, ref, atol=5e-2, rtol=5e-2)

    # --- Multi-tile + ragged-tail check (exercises the batch grid) ---
    B2 = 200                                   # cdiv(200, 64) = 4 tiles, last is ragged
    x2 = jax.random.normal(k_x, (B2, D_IN), dtype=jnp.float32)
    ref2 = reference_forward(x2, w1, b1, w2, b2)
    out2 = flmodel_forward(x2, w1, b1, w2, b2, block_b=64,
                           compute_dtype=jnp.float32)
    jax.block_until_ready(out2)
    assert out2.shape == (B2, D_OUT)
    assert jnp.allclose(out2, ref2, atol=1e-5, rtol=1e-5)

    print("KERNEL_OK")
</pallas_src>

<mosaic_0001>
module attributes {stable_mosaic.version = 11 : i64} {
  func.func @flmodel_kernel(%arg0: i32, %arg1: memref<8x165xf32, #tpu.memory_space<vmem>>, %arg2: memref<165x50xf32, #tpu.memory_space<vmem>>, %arg3: memref<1x50xf32, #tpu.memory_space<vmem>>, %arg4: memref<1x50xf32, #tpu.memory_space<vmem>>, %arg5: memref<1x1xf32, #tpu.memory_space<vmem>>, %arg6: memref<8x2xf32, #tpu.memory_space<vmem>>) attributes {dimension_semantics = [#tpu.dimension_semantics<parallel>], iteration_bounds = array<i64: 1>, scalar_prefetch = 0 : i64, scratch_operands = 0 : i64, tpu.core_type = #tpu.core_type<tc>, window_params = [{transform_indices = @transform_0, window_bounds = array<i64: 8, 165>}, {pipeline_mode = #tpu.pipeline_mode<synchronous>, transform_indices = @transform_1, window_bounds = array<i64: 165, 50>}, {pipeline_mode = #tpu.pipeline_mode<synchronous>, transform_indices = @transform_2, window_bounds = array<i64: 1, 50>}, {pipeline_mode = #tpu.pipeline_mode<synchronous>, transform_indices = @transform_3, window_bounds = array<i64: 1, 50>}, {pipeline_mode = #tpu.pipeline_mode<synchronous>, transform_indices = @transform_4, window_bounds = array<i64: 1, 1>}, {transform_indices = @transform_5, window_bounds = array<i64: 8, 2>}]} {
    %c0 = arith.constant 0 : index
    %c0_0 = arith.constant 0 : index
    %0 = vector.load %arg1[%c0, %c0_0] : memref<8x165xf32, #tpu.memory_space<vmem>>, vector<8x165xf32>
    %c0_1 = arith.constant 0 : index
    %c0_2 = arith.constant 0 : index
    %1 = vector.load %arg2[%c0_1, %c0_2] : memref<165x50xf32, #tpu.memory_space<vmem>>, vector<165x50xf32>
    %cst = arith.constant dense<0.000000e+00> : vector<8x50xf32>
    %2 = tpu.matmul %0, %1, %cst {dimension_numbers = #tpu.dot_dimension_numbers<[1], [0], [0], [1], [0, 0, 1, 1], [], []>} : vector<8x165xf32>, vector<165x50xf32>, vector<8x50xf32> -> vector<8x50xf32>
    %c0_3 = arith.constant 0 : index
    %c0_4 = arith.constant 0 : index
    %3 = vector.load %arg3[%c0_3, %c0_4] : memref<1x50xf32, #tpu.memory_space<vmem>>, vector<1x50xf32>
    %4 = vector.broadcast %3 : vector<1x50xf32> to vector<8x50xf32>
    %5 = arith.addf %2, %4 : vector<8x50xf32>
    %cst_5 = arith.constant 0.000000e+00 : f32
    %6 = vector.broadcast %cst_5 : f32 to vector<8x50xf32>
    %7 = arith.maximumf %5, %6 : vector<8x50xf32>
    %c0_6 = arith.constant 0 : index
    %c0_7 = arith.constant 0 : index
    %8 = vector.load %arg4[%c0_6, %c0_7] : memref<1x50xf32, #tpu.memory_space<vmem>>, vector<1x50xf32>
    %9 = vector.broadcast %8 : vector<1x50xf32> to vector<8x50xf32>
    %10 = arith.mulf %7, %9 : vector<8x50xf32>
    %cst_8 = arith.constant dense<0.000000e+00> : vector<8xf32>
    %11 = vector.multi_reduction <add>, %10, %cst_8 [1] : vector<8x50xf32> to vector<8xf32>
    %12 = vector.shape_cast %11 : vector<8xf32> to vector<8x1xf32>
    %c0_9 = arith.constant 0 : index
    %c0_10 = arith.constant 0 : index
    %13 = vector.load %arg5[%c0_9, %c0_10] : memref<1x1xf32, #tpu.memory_space<vmem>>, vector<1x1xf32>
    %14 = vector.broadcast %13 : vector<1x1xf32> to vector<8x1xf32>
    %15 = arith.addf %12, %14 : vector<8x1xf32>
    %16 = math.absf %15 : vector<8x1xf32>
    %cst_11 = arith.constant 0.000000e+00 : f32
    %17 = vector.broadcast %cst_11 : f32 to vector<8x1xf32>
    %18 = arith.subf %17, %16 : vector<8x1xf32>
    %19 = math.exp %18 : vector<8x1xf32>
    %20 = math.log1p %19 : vector<8x1xf32>
    %cst_12 = arith.constant 0.000000e+00 : f32
    %21 = vector.broadcast %cst_12 : f32 to vector<8x1xf32>
    %22 = arith.subf %21, %15 : vector<8x1xf32>
    %23 = tpu.concatenate %22, %15 in 1 : vector<8x1xf32>, vector<8x1xf32> -> vector<8x2xf32>
    %cst_13 = arith.constant 0.000000e+00 : f32
    %24 = vector.broadcast %cst_13 : f32 to vector<8x2xf32>
    %25 = arith.maximumf %23, %24 : vector<8x2xf32>
    %26 = vector.broadcast %20 : vector<8x1xf32> to vector<8x2xf32>
    %27 = arith.addf %26, %25 : vector<8x2xf32>
    %cst_14 = arith.constant 0.000000e+00 : f32
    %28 = vector.broadcast %cst_14 : f32 to vector<8x2xf32>
    %29 = arith.subf %28, %27 : vector<8x2xf32>
    %c0_15 = arith.constant 0 : index
    %c0_16 = arith.constant 0 : index
    %30 = vector.load %arg6[%c0_15, %c0_16] : memref<8x2xf32, #tpu.memory_space<vmem>>, vector<8x2xf32>
    tpu.vector_store %arg6[%c0_15, %c0_16], %29 {strides = array<i32>} : memref<8x2xf32, #tpu.memory_space<vmem>>, vector<8x2xf32>,
    return
  }
  func.func @transform_0(%arg0: i32) -> (i32, i32) {
    %c0_i32 = arith.constant 0 : i32
    %c0_i32_0 = arith.constant 0 : i32
    return %arg0, %c0_i32 : i32, i32
  }
  func.func @transform_1(%arg0: i32) -> (i32, i32) {
    %c0_i32 = arith.constant 0 : i32
    %c0_i32_0 = arith.constant 0 : i32
    %c0_i32_1 = arith.constant 0 : i32
    return %c0_i32, %c0_i32_0 : i32, i32
  }
  func.func @transform_2(%arg0: i32) -> (i32, i32) {
    %c0_i32 = arith.constant 0 : i32
    %c0_i32_0 = arith.constant 0 : i32
    %c0_i32_1 = arith.constant 0 : i32
    return %c0_i32, %c0_i32_0 : i32, i32
  }
  func.func @transform_3(%arg0: i32) -> (i32, i32) {
    %c0_i32 = arith.constant 0 : i32
    %c0_i32_0 = arith.constant 0 : i32
    %c0_i32_1 = arith.constant 0 : i32
    return %c0_i32, %c0_i32_0 : i32, i32
  }
  func.func @transform_4(%arg0: i32) -> (i32, i32) {
    %c0_i32 = arith.constant 0 : i32
    %c0_i32_0 = arith.constant 0 : i32
    %c0_i32_1 = arith.constant 0 : i32
    return %c0_i32, %c0_i32_0 : i32, i32
  }
  func.func @transform_5(%arg0: i32) -> (i32, i32) {
    %c0_i32 = arith.constant 0 : i32
    %c0_i32_0 = arith.constant 0 : i32
    return %arg0, %c0_i32 : i32, i32
  }
}

</mosaic_0001>

<llo_original>
// kernel: tpu_custom_call.1
$region0: #{tpu_custom_call.1}
  #allocation0 [shape = 'u32[]', space=smem, size = 0x4, offset = 0x4, fixed_abs, tag = 'smem constant byte address 0x4 - core index']
  #allocation1 [shape = 'u32[144,128]{1,0:T(1,128)}', space=vmem, size = 0x12000, scoped, tag = 'internal scratch']
  #allocation2 [shape = 'f32[1,1]{1,0:T(1,128)S(1)}', space=vmem, size = 0x200, scoped, tag = 'scoped memory for tpu_custom_call.1']
  %s0 = inlined_call_operand.vmem [shape: f32[8,165], index: 0, kind: input, shape index: {}]
  %s1 = inlined_call_operand.vmem [shape: f32[165,50], index: 1, kind: input, shape index: {}]
  %s2 = inlined_call_operand.vmem [shape: f32[1,50], index: 2, kind: input, shape index: {}]
  %s3 = inlined_call_operand.vmem [shape: f32[1,50], index: 3, kind: input, shape index: {}]
  %s4 = inlined_call_operand.<no memory space> [shape: f32[1,1], index: 4, kind: input, shape index: {}]
  %s5 = inlined_call_operand.vmem [shape: f32[8,2], index: 5, kind: output, shape index: {}]
  %s6 = sld [smem:[#allocation0]]
  $region30: #{tpu_custom_call.1} parent=0
    _
  %s8 = ssub.s32 1, %s6
  %s9 = scalar_select 0, %s8, %s6
  %v10 = vstv %s4
  %11 = vst [vmem:[#allocation2] sm:$0x1] %v10
  // Predicated region
  $region2: #{tpu_custom_call.1} parent=0 // pred_check
    _
  $region3: #{tpu_custom_call.1} parent=0 // pred_check_branch
    %13 = sbr.rel (0) target = $region5
  $region4: #{tpu_custom_call.1} parent=0 // pred_region
    _
  $region5: #{tpu_custom_call.1} parent=0 // pred_fallthru
    _
  // Predicated region
  $region6: #{tpu_custom_call.1} parent=0 // pred_check
    _
  $region7: #{tpu_custom_call.1} parent=0 // pred_check_branch
    %15 = sbr.rel (0) target = $region9
  $region8: #{tpu_custom_call.1} parent=0 // pred_region
    _
  $region9: #{tpu_custom_call.1} parent=0 // pred_fallthru
    _
  // Predicated region
  $region10: #{tpu_custom_call.1} parent=0 // pred_check
    _
  $region11: #{tpu_custom_call.1} parent=0 // pred_check_branch
    %17 = sbr.rel (0) target = $region13
  $region12: #{tpu_custom_call.1} parent=0 // pred_region
    _
  $region13: #{tpu_custom_call.1} parent=0 // pred_fallthru
    _
  // Predicated region
  $region14: #{tpu_custom_call.1} parent=0 // pred_check
    _
  $region15: #{tpu_custom_call.1} parent=0 // pred_check_branch
    %19 = sbr.rel (0) target = $region17
  $region16: #{tpu_custom_call.1} parent=0 // pred_region
    _
  $region17: #{tpu_custom_call.1} parent=0 // pred_fallthru
    _
  // Predicated region
  $region18: #{tpu_custom_call.1} parent=0 // pred_check
    _
  $region19: #{tpu_custom_call.1} parent=0 // pred_check_branch
    %21 = sbr.rel (0) target = $region21
  $region20: #{tpu_custom_call.1} parent=0 // pred_region
    _
  $region21: #{tpu_custom_call.1} parent=0 // pred_fallthru
    _
  %v22 = vld [vmem:[%s0] sm:$0xff]
  %v23 = vld [vmem:[%s0 + $0x8] sm:$0xff]
  %v24 = vld [vmem:[%s1] sm:$0xff]
  %v25 = vld [vmem:[%s1 + $0x8] sm:$0xff]
  %v26 = vld [vmem:[%s1 + $0x10] sm:$0xff]
  %v27 = vld [vmem:[%s1 + $0x18] sm:$0xff]
  %v28 = vld [vmem:[%s1 + $0x20] sm:$0xff]
  %v29 = vld [vmem:[%s1 + $0x28] sm:$0xff]
  %v30 = vld [vmem:[%s1 + $0x30] sm:$0xff]
  %v31 = vld [vmem:[%s1 + $0x38] sm:$0xff]
  %v32 = vld [vmem:[%s1 + $0x40] sm:$0xff]
  %v33 = vld [vmem:[%s1 + $0x48] sm:$0xff]
  %v34 = vld [vmem:[%s1 + $0x50] sm:$0xff]
  %v35 = vld [vmem:[%s1 + $0x58] sm:$0xff]
  %v36 = vld [vmem:[%s1 + $0x60] sm:$0xff]
  %v37 = vld [vmem:[%s1 + $0x68] sm:$0xff]
  %v38 = vld [vmem:[%s1 + $0x70] sm:$0xff]
  %v39 = vld [vmem:[%s1 + $0x78] sm:$0xff]
  %v40 = vld [vmem:[%s1 + $0x80] sm:$0xff]
  %v41 = vld [vmem:[%s1 + $0x88] sm:$0xff]
  %v42 = vld [vmem:[%s1 + $0x90] sm:$0xff]
  %v43 = vld [vmem:[%s1 + $0x98] sm:$0xff]
  %v44 = vld [vmem:[%s1 + $0xa0] sm:$0x1f]
  %v45 = vld [vmem:[%s2] sm:$0x1]
  %v47 = vlaneseq
  %v48 = vshrl.u32 %v47, 7
  %v49 = vsub.s32 0, %v48
  %v50 = vrot.slane %v45, %v49
  %vm52 = vcmask 302080
  %v54 = vsel %vm52, %v23, 0
  %vm56 = vcmask 1044480
  %v58 = vsel %vm56, %v44, 0
  %60 = vmatprep.subr.mxu0 0.0
  %61 = vmatpush1.msra.mxu0 %v24
  %62 = vmatprep.subr.mxu0 0.0
  %63 = vmatpush1.msra.mxu0 %v25
  %64 = vmatprep.subr.mxu0 0.0
  %65 = vmatpush1.msra.mxu0 %v26
  %66 = vmatprep.subr.mxu0 0.0
  %67 = vmatpush1.msra.mxu0 %v27
  %68 = vmatprep.subr.mxu0 0.0
  %69 = vmatpush1.msra.mxu0 %v28
  %70 = vmatprep.subr.mxu0 0.0
  %71 = vmatpush1.msra.mxu0 %v29
  %72 = vmatprep.subr.mxu0 0.0
  %73 = vmatpush1.msra.mxu0 %v30
  %74 = vmatprep.subr.mxu0 0.0
  %75 = vmatpush1.msra.mxu0 %v31
  %76 = vmatprep.subr.mxu0 0.0
  %77 = vmatpush1.msra.mxu0 %v32
  %78 = vmatprep.subr.mxu0 0.0
  %79 = vmatpush1.msra.mxu0 %v33
  %80 = vmatprep.subr.mxu0 0.0
  %81 = vmatpush1.msra.mxu0 %v34
  %82 = vmatprep.subr.mxu0 0.0
  %83 = vmatpush1.msra.mxu0 %v35
  %84 = vmatprep.subr.mxu0 0.0
  %85 = vmatpush1.msra.mxu0 %v36
  %86 = vmatprep.subr.mxu0 0.0
  %87 = vmatpush1.msra.mxu0 %v37
  %88 = vmatprep.subr.mxu0 0.0
  %89 = vmatpush1.msra.mxu0 %v38
  %90 = vmatprep.subr.mxu0 0.0
  %91 = vmatpush1.msra.mxu0 %v39
  %92 = vmatprep.subr.mxu0 0.0
  %93 = vmatpush1.msra.mxu0 %v40
  %94 = vmatprep.subr.mxu0 0.0
  %95 = vmatpush1.msra.mxu0 %v41
  %96 = vmatprep.subr.mxu0 0.0
  %97 = vmatpush1.msra.mxu0 %v42
  %98 = vmatprep.subr.mxu0 0.0
  %99 = vmatpush1.msra.mxu0 %v43
  %100 = vmatprep.subr.mxu0 0.0
  %101 = vmatpush1.msra.mxu0 %v58
  %102 = vmatprep.subr.mxu0 0.0
  %103 = vmatpush1.msra.mxu0 0.0
  %104 = vmatprep.subr.mxu0 0.0
  %105 = vmatpush1.msra.mxu0 0.0
  %106 = vmatprep.subr.mxu0 0.0
  %107 = vmatpush1.msra.mxu0 0.0
  %108 = vmatprep.subr.mxu0 0.0
  %109 = vmatpush1.msra.mxu0 0.0
  %110 = vmatprep.subr.mxu0 0.0
  %111 = vmatpush1.msra.mxu0 0.0
  %112 = vmatprep.subr.mxu0 0.0
  %113 = vmatpush1.msra.mxu0 0.0
  %114 = vmatprep.subr.mxu0 0.0
  %115 = vmatpush1.msra.mxu0 0.0
  %116 = vmatprep.subr.mxu0 0.0
  %117 = vmatpush1.msra.mxu0 0.0
  %118 = vmatprep.subr.mxu0 0.0
  %119 = vmatpush1.msra.mxu0 0.0
  %120 = vmatprep.subr.mxu0 0.0
  %121 = vmatpush1.msra.mxu0 0.0
  %122 = vmatprep.subr.mxu0 0.0
  %123 = vmatpush1.msra.mxu0 0.0
  %124 = vmatprep.mubr.f32.mxu0 %v54
  %125 = vmatmul.mubr.f32.gmra.mrb[0].mxu0 %v22
  %v126 = vpop.f32.mrb[0].mxu0
  %v127 = vadd.f32 %v50, %v126
  %v128 = vpop.f32.mrb[0].mxu0
  %129 = vdwg.mxu0
  %v130 = vmax.f32 %v127, 0.0
  %v131 = vld [vmem:[%s3] sm:$0x1]
  %v133 = vlaneseq
  %v134 = vshrl.u32 %v133, 7
  %v135 = vsub.s32 0, %v134
  %v136 = vrot.slane %v131, %v135
  %v138 = vmul.f32 %v130, %v136
  %vm139 = vcmask 408576
  %v140 = vsel %vm139, %v138, 0.0
  %141 = vadd.xlane.f32.xlu0 %v140
  %v142 = vpop.xlane.xlu0 %141
  %v143 = vld [vmem:[#allocation2] sm:$0x1]
  %v145 = vlaneseq
  %v146 = vshrl.u32 %v145, 7
  %v147 = vsub.s32 0, %v146
  %v148 = vrot.slane %v143, %v147
  %v150 = vadd.f32 %v142, %v148
  %v151 = vand.u32 2147483647, %v150
  %v152 = vsub.f32 0.0, %v151
  %v153 = vmul.f32 %v152, 1.442695
  %v154 = vpow.pop %v153
  %v155 = vadd.f32 %v154, 1.0
  %v156 = vlog2.pop %v155
  %v157 = vmul.f32 %v156, 0.6931472
  %v158 = vmul.f32 -0.5, %v154
  %v159 = vadd.f32 %v158, 1.0
  %v160 = vmul.f32 %v159, %v154
  %v161 = vand.u32 2147483647, %v154
  %vm162 = vcmp.lt.f32.partialorder %v161, 0.0004427343
  %v163 = vsel %vm162, %v160, %v157
  %v164 = vsub.f32 0.0, %v150
  %166 = vrot.lane.b32.xlu0 %v150, 1
  %v167 = vpop.permute.xlu0 %166
  %vm169 = vcmask 7168
  %v170 = vsel %vm169, %v164, %v167
  %v171 = vmax.f32 %v170, 0.0
  %173 = vset.pattern.permute.xlu0 0
  %174 = vperm.xlu0 %173, %v163
  %v175 = vpop.permute.xlu0 %174
  %v177 = vadd.f32 %v175, %v171
  %v178 = vsub.f32 0.0, %v177
  %vm179 = vcmask 15360
  %180 = vst.msk [vmem:[%s5] sm:$0xff] %vm179, %v178
  // Predicated region
  $region22: #{tpu_custom_call.1} parent=0 // pred_check
    _
  $region23: #{tpu_custom_call.1} parent=0 // pred_check_branch
    %182 = sbr.rel (0) target = $region25
  $region24: #{tpu_custom_call.1} parent=0 // pred_region
    _
  $region25: #{tpu_custom_call.1} parent=0 // pred_fallthru
    _
  // Predicated region
  $region26: #{tpu_custom_call.1} parent=0 // pred_check
    _
  $region27: #{tpu_custom_call.1} parent=0 // pred_check_branch
    %184 = sbr.rel (0) target = $region29
  $region28: #{tpu_custom_call.1} parent=0 // pred_region
    _
  $region29: #{tpu_custom_call.1} parent=0 // pred_fallthru
    _

</llo_original>
